<compile_context>
chip_gen: v5e
topology: v5e:2x2
jax: 0.10.0
libtpu: 0.0.40
codegen_flags: <defaults>
</compile_context>

<pallas_src>
import jax
import jax.numpy as jnp
from jax.experimental import pallas as pl
from jax.experimental.pallas import tpu as pltpu

EPS = 1e-5
LANE = 128


def _round_up(x, m):
    return (x + m - 1) // m * m


def encoder_kernel(x_ref, w_ref, b_ref, gamma_ref, beta_ref, o_ref):
    # Linear on the MXU: (B, S) @ (S, TH), bf16 inputs, f32 accumulation.
    h = jnp.dot(x_ref[...], w_ref[...], preferred_element_type=jnp.float32)
    h = h + b_ref[...]            # f32 bias row
    h = jnp.maximum(h, 0.0)       # ReLU
    # BatchNorm1d (training mode): batch mean and biased variance, all f32.
    mean = jnp.mean(h, axis=0, keepdims=True)
    centered = h - mean
    var = jnp.mean(centered * centered, axis=0, keepdims=True)
    # Fold gamma into the (1, TH) scale row -> single (B, TH) multiply + add.
    scale = jax.lax.rsqrt(var + EPS) * gamma_ref[...]
    o_ref[...] = (centered * scale + beta_ref[...]).astype(o_ref.dtype)


def network_encoder_forward(state, w_t, b, gamma, beta, *, matmul_dtype=jnp.bfloat16):
    """Forward pass of NetworkEncoder.

    state: (B, state_size) or (state_size,)
    w_t:   (state_size, fc1_units)   -- fc1.weight transposed
    b:     (fc1_units,)
    gamma: (fc1_units,)               -- BatchNorm weight
    beta:  (fc1_units,)               -- BatchNorm bias
    """
    if state.ndim < 2:
        # NOTE: PyTorch training-mode BatchNorm1d raises for a batch of one; we follow
        # the module's forward() and simply promote to (1, S).
        state = state[None, :]
    B, S = state.shape
    H = w_t.shape[1]
    H_pad = _round_up(H, LANE)

    # Pad the feature dim to a lane-dense multiple of 128. Zero weight/bias/gamma/beta
    # columns produce exactly-zero outputs and do not perturb real features.
    if H_pad != H:
        pad = H_pad - H
        w_t = jnp.pad(w_t, ((0, 0), (0, pad)))
        b = jnp.pad(b, (0, pad))
        gamma = jnp.pad(gamma, (0, pad))
        beta = jnp.pad(beta, (0, pad))

    x = state.astype(matmul_dtype)
    w = w_t.astype(matmul_dtype)
    b2 = b.astype(jnp.float32).reshape(1, H_pad)
    g2 = gamma.astype(jnp.float32).reshape(1, H_pad)
    be2 = beta.astype(jnp.float32).reshape(1, H_pad)

    # Tile over the feature dim (BN stats are per-feature, so H tiles are independent).
    if H_pad <= 512:
        tile_h = H_pad
    else:
        tile_h = next(t for t in (512, 256, 128) if H_pad % t == 0)
    grid = (H_pad // tile_h,)

    mm_item = jnp.dtype(matmul_dtype).itemsize
    tile_bytes = (B * S * mm_item          # resident x
                  + S * tile_h * mm_item   # weight tile
                  + 3 * tile_h * 4         # bias / gamma / beta rows
                  + B * tile_h * 4)        # output tile
    vmem_limit = int(min(max(4 * tile_bytes, 8 << 20), 100 << 20))

    vmem = pltpu.MemorySpace.VMEM
    out = pl.pallas_call(
        encoder_kernel,
        out_shape=jax.ShapeDtypeStruct((B, H_pad), jnp.float32),
        grid_spec=pltpu.PrefetchScalarGridSpec(
            num_scalar_prefetch=0,
            grid=grid,
            in_specs=[
                pl.BlockSpec((B, S), lambda j: (0, 0), memory_space=vmem),       # x (resident)
                pl.BlockSpec((S, tile_h), lambda j: (0, j), memory_space=vmem),  # W tile
                pl.BlockSpec((1, tile_h), lambda j: (0, j), memory_space=vmem),  # bias
                pl.BlockSpec((1, tile_h), lambda j: (0, j), memory_space=vmem),  # gamma
                pl.BlockSpec((1, tile_h), lambda j: (0, j), memory_space=vmem),  # beta
            ],
            out_specs=pl.BlockSpec((B, tile_h), lambda j: (0, j), memory_space=vmem),
        ),
        compiler_params=pltpu.CompilerParams(
            dimension_semantics=("parallel",),
            vmem_limit_bytes=vmem_limit,
        ),
    )(x, w, b2, g2, be2)

    return out if H_pad == H else out[:, :H]


def init_params(key, state_size, fc1_units):
    """nn.Linear default U(-1/sqrt(fan_in), 1/sqrt(fan_in)); BatchNorm gamma=1, beta=0."""
    k_w, k_b = jax.random.split(key)
    bound = 1.0 / jnp.sqrt(jnp.float32(state_size))
    # stored already transposed: (state_size, fc1_units)
    w_t = jax.random.uniform(k_w, (state_size, fc1_units), jnp.float32, -bound, bound)
    b = jax.random.uniform(k_b, (fc1_units,), jnp.float32, -bound, bound)
    gamma = jnp.ones((fc1_units,), jnp.float32)
    beta = jnp.zeros((fc1_units,), jnp.float32)
    return w_t, b, gamma, beta


def reference_forward(state, w_t, b, gamma, beta, matmul_dtype=jnp.float32):
    if state.ndim < 2:
        state = state[None, :]
    h = jnp.dot(state.astype(matmul_dtype), w_t.astype(matmul_dtype),
                preferred_element_type=jnp.float32) + b[None, :].astype(jnp.float32)
    h = jnp.maximum(h, 0.0)
    mean = jnp.mean(h, axis=0, keepdims=True)
    var = jnp.mean((h - mean) ** 2, axis=0, keepdims=True)
    return (h - mean) * jax.lax.rsqrt(var + EPS) * gamma[None, :] + beta[None, :]


if __name__ == "__main__":
    key = jax.random.PRNGKey(0)
    k_param, k_x = jax.random.split(key)

    batch = 8
    state_size = 32
    fc1_units = 400  # module default; exercises the 400 -> 512 lane-dense padding path

    w_t, b, gamma, beta = init_params(k_param, state_size, fc1_units)
    state = jax.random.normal(k_x, (batch, state_size), jnp.float32)

    out = network_encoder_forward(state, w_t, b, gamma, beta)
    out = jax.block_until_ready(out)

    assert out.shape == (batch, fc1_units)
    assert bool(jnp.all(jnp.isfinite(out)))

    # Tight check against a reference using the same bf16-input matmul (f32 accumulate).
    ref_matched = reference_forward(state, w_t, b, gamma, beta, matmul_dtype=jnp.bfloat16)
    assert jnp.allclose(out, ref_matched, atol=1e-3, rtol=1e-3), "mismatch vs matched-dtype reference"

    # Informational only: distance to pure-f32 module semantics (bf16 matmul inputs used by design).
    ref_f32 = reference_forward(state, w_t, b, gamma, beta, matmul_dtype=jnp.float32)
    _max_diff_vs_f32 = float(jnp.max(jnp.abs(out - ref_f32)))

    print("KERNEL_OK")
</pallas_src>

<mosaic_0001>
module attributes {stable_mosaic.version = 11 : i64} {
  func.func @encoder_kernel(%arg0: i32, %arg1: memref<8x32xbf16, #tpu.memory_space<vmem>>, %arg2: memref<32x512xbf16, #tpu.memory_space<vmem>>, %arg3: memref<1x512xf32, #tpu.memory_space<vmem>>, %arg4: memref<1x512xf32, #tpu.memory_space<vmem>>, %arg5: memref<1x512xf32, #tpu.memory_space<vmem>>, %arg6: memref<8x512xf32, #tpu.memory_space<vmem>>) attributes {dimension_semantics = [#tpu.dimension_semantics<parallel>], iteration_bounds = array<i64: 1>, scalar_prefetch = 0 : i64, scratch_operands = 0 : i64, tpu.core_type = #tpu.core_type<tc>, window_params = [{pipeline_mode = #tpu.pipeline_mode<synchronous>, transform_indices = @transform_0, window_bounds = array<i64: 8, 32>}, {transform_indices = @transform_1, window_bounds = array<i64: 32, 512>}, {transform_indices = @transform_2, window_bounds = array<i64: 1, 512>}, {transform_indices = @transform_3, window_bounds = array<i64: 1, 512>}, {transform_indices = @transform_4, window_bounds = array<i64: 1, 512>}, {transform_indices = @transform_5, window_bounds = array<i64: 8, 512>}]} {
    %c0 = arith.constant 0 : index
    %c0_0 = arith.constant 0 : index
    %0 = vector.load %arg1[%c0, %c0_0] : memref<8x32xbf16, #tpu.memory_space<vmem>>, vector<8x32xbf16>
    %c0_1 = arith.constant 0 : index
    %c0_2 = arith.constant 0 : index
    %1 = vector.load %arg2[%c0_1, %c0_2] : memref<32x512xbf16, #tpu.memory_space<vmem>>, vector<32x512xbf16>
    %cst = arith.constant dense<0.000000e+00> : vector<8x512xf32>
    %2 = tpu.matmul %0, %1, %cst {dimension_numbers = #tpu.dot_dimension_numbers<[1], [0], [0], [1], [0, 0, 1, 1], [], []>} : vector<8x32xbf16>, vector<32x512xbf16>, vector<8x512xf32> -> vector<8x512xf32>
    %c0_3 = arith.constant 0 : index
    %c0_4 = arith.constant 0 : index
    %3 = vector.load %arg3[%c0_3, %c0_4] : memref<1x512xf32, #tpu.memory_space<vmem>>, vector<1x512xf32>
    %4 = vector.broadcast %3 : vector<1x512xf32> to vector<8x512xf32>
    %5 = arith.addf %2, %4 : vector<8x512xf32>
    %cst_5 = arith.constant 0.000000e+00 : f32
    %6 = vector.broadcast %cst_5 : f32 to vector<8x512xf32>
    %7 = arith.maximumf %5, %6 : vector<8x512xf32>
    %cst_6 = arith.constant dense<0.000000e+00> : vector<512xf32>
    %8 = vector.multi_reduction <add>, %7, %cst_6 [0] : vector<8x512xf32> to vector<512xf32>
    %9 = vector.shape_cast %8 : vector<512xf32> to vector<1x512xf32>
    %cst_7 = arith.constant 8.000000e+00 : f32
    %10 = vector.broadcast %cst_7 : f32 to vector<1x512xf32>
    %11 = arith.divf %9, %10 : vector<1x512xf32>
    %12 = vector.broadcast %11 : vector<1x512xf32> to vector<8x512xf32>
    %13 = arith.subf %7, %12 : vector<8x512xf32>
    %14 = arith.mulf %13, %13 : vector<8x512xf32>
    %cst_8 = arith.constant dense<0.000000e+00> : vector<512xf32>
    %15 = vector.multi_reduction <add>, %14, %cst_8 [0] : vector<8x512xf32> to vector<512xf32>
    %16 = vector.shape_cast %15 : vector<512xf32> to vector<1x512xf32>
    %cst_9 = arith.constant 8.000000e+00 : f32
    %17 = vector.broadcast %cst_9 : f32 to vector<1x512xf32>
    %18 = arith.divf %16, %17 : vector<1x512xf32>
    %cst_10 = arith.constant 9.99999974E-6 : f32
    %19 = vector.broadcast %cst_10 : f32 to vector<1x512xf32>
    %20 = arith.addf %18, %19 : vector<1x512xf32>
    %21 = math.rsqrt %20 : vector<1x512xf32>
    %c0_11 = arith.constant 0 : index
    %c0_12 = arith.constant 0 : index
    %22 = vector.load %arg4[%c0_11, %c0_12] : memref<1x512xf32, #tpu.memory_space<vmem>>, vector<1x512xf32>
    %23 = arith.mulf %21, %22 : vector<1x512xf32>
    %24 = vector.broadcast %23 : vector<1x512xf32> to vector<8x512xf32>
    %25 = arith.mulf %13, %24 : vector<8x512xf32>
    %c0_13 = arith.constant 0 : index
    %c0_14 = arith.constant 0 : index
    %26 = vector.load %arg5[%c0_13, %c0_14] : memref<1x512xf32, #tpu.memory_space<vmem>>, vector<1x512xf32>
    %27 = vector.broadcast %26 : vector<1x512xf32> to vector<8x512xf32>
    %28 = arith.addf %25, %27 : vector<8x512xf32>
    %c0_15 = arith.constant 0 : index
    %c0_16 = arith.constant 0 : index
    %29 = vector.load %arg6[%c0_15, %c0_16] : memref<8x512xf32, #tpu.memory_space<vmem>>, vector<8x512xf32>
    tpu.vector_store %arg6[%c0_15, %c0_16], %28 {strides = array<i32>} : memref<8x512xf32, #tpu.memory_space<vmem>>, vector<8x512xf32>,
    return
  }
  func.func @transform_0(%arg0: i32) -> (i32, i32) {
    %c0_i32 = arith.constant 0 : i32
    %c0_i32_0 = arith.constant 0 : i32
    %c0_i32_1 = arith.constant 0 : i32
    return %c0_i32, %c0_i32_0 : i32, i32
  }
  func.func @transform_1(%arg0: i32) -> (i32, i32) {
    %c0_i32 = arith.constant 0 : i32
    %c0_i32_0 = arith.constant 0 : i32
    return %c0_i32, %arg0 : i32, i32
  }
  func.func @transform_2(%arg0: i32) -> (i32, i32) {
    %c0_i32 = arith.constant 0 : i32
    %c0_i32_0 = arith.constant 0 : i32
    return %c0_i32, %arg0 : i32, i32
  }
  func.func @transform_3(%arg0: i32) -> (i32, i32) {
    %c0_i32 = arith.constant 0 : i32
    %c0_i32_0 = arith.constant 0 : i32
    return %c0_i32, %arg0 : i32, i32
  }
  func.func @transform_4(%arg0: i32) -> (i32, i32) {
    %c0_i32 = arith.constant 0 : i32
    %c0_i32_0 = arith.constant 0 : i32
    return %c0_i32, %arg0 : i32, i32
  }
  func.func @transform_5(%arg0: i32) -> (i32, i32) {
    %c0_i32 = arith.constant 0 : i32
    %c0_i32_0 = arith.constant 0 : i32
    return %c0_i32, %arg0 : i32, i32
  }
}

</mosaic_0001>

<llo_original>
// kernel: tpu_custom_call.1
$region0: #{tpu_custom_call.1}
  #allocation0 [shape = 'u32[]', space=smem, size = 0x4, offset = 0x4, fixed_abs, tag = 'smem constant byte address 0x4 - core index']
  #allocation1 [shape = 'u32[72,128]{1,0:T(1,128)}', space=vmem, size = 0x9000, scoped, tag = 'internal scratch']
  %s0 = inlined_call_operand.hbm [shape: bf16[8,32], index: 0, kind: input, shape index: {}]
  %s1 = inlined_call_operand.hbm [shape: bf16[32,512], index: 1, kind: input, shape index: {}]
  %s2 = inlined_call_operand.hbm [shape: f32[1,512], index: 2, kind: input, shape index: {}]
  %s3 = inlined_call_operand.hbm [shape: f32[1,512], index: 3, kind: input, shape index: {}]
  %s4 = inlined_call_operand.hbm [shape: f32[1,512], index: 4, kind: input, shape index: {}]
  %s5 = inlined_call_operand.hbm [shape: f32[8,512], index: 5, kind: output, shape index: {}]
  %s6 = sld [smem:[#allocation0]]
  $region50: #{tpu_custom_call.1} parent=0
    _
  %s8 = ssub.s32 1, %s6
  %s9 = scalar_select 0, %s8, %s6
  $region1: #{tpu_custom_call.1} parent=0
    #allocation2 [shape = 'u8[2048]{0}', space=vmem, size = 0x800, scoped, tag = 'input window, operand 0, single buffered']
    #allocation3 [shape = 's32[1]{0}', space=sflag, size = 0x4, scoped, tag = 'scoped memory for tpu_custom_call.1']
    #allocation4 [shape = 's32[1]{0}', space=sflag, size = 0x4, scoped, tag = 'scoped memory for tpu_custom_call.1']
    #allocation5 [shape = 'u8[32768]{0}', space=vmem, size = 0x8000, scoped, tag = 'input window, operand 1, single buffered']
    #allocation6 [shape = 's32[1]{0}', space=sflag, size = 0x4, scoped, tag = 'scoped memory for tpu_custom_call.1']
    #allocation7 [shape = 'u8[2048]{0}', space=vmem, size = 0x800, scoped, tag = 'input window, operand 2, single buffered']
    #allocation8 [shape = 'u8[2048]{0}', space=vmem, size = 0x800, scoped, tag = 'input window, operand 3, single buffered']
    #allocation9 [shape = 's32[1]{0}', space=sflag, size = 0x4, scoped, tag = 'scoped memory for tpu_custom_call.1']
    #allocation10 [shape = 'u8[2048]{0}', space=vmem, size = 0x800, scoped, tag = 'input window, operand 4, single buffered']
    #allocation11 [shape = 'u8[16384]{0}', space=vmem, size = 0x4000, scoped, tag = 'output window, operand 0, single buffered']
    %10 = vsyncpa [#allocation3], 0
    %11 = vsyncpa [#allocation6], 0
    %12 = vsyncpa [#allocation9], 0
    %13 = vsyncpa [#allocation4], 0
    // Predicated region
    $region2: #{tpu_custom_call.1} parent=1 // pred_check
      _
    $region3: #{tpu_custom_call.1} parent=1 // pred_check_branch
      %15 = sbr.rel (0) target = $region5
    $region4: #{tpu_custom_call.1} parent=1 // pred_region
      %17 = vsyncadd [#allocation3], 0
      %s19 = sshll.u32 %s0, 4
      %s20 = int_to_ptr.hbm [resolvable:$true] %s19
      %s21 = sshll.u32 [#allocation2], 4
      %s22 = int_to_ptr.vmem [resolvable:$true] %s21
      %24 = dma.hbm_to_vmem [thread:$0]  %s20, 64, %s22, [#allocation3]
    $region5: #{tpu_custom_call.1} parent=1 // pred_fallthru
      _
    // Predicated region
    $region6: #{tpu_custom_call.1} parent=1 // pred_check
      _
    $region7: #{tpu_custom_call.1} parent=1 // pred_check_branch
      %26 = sbr.rel (0) target = $region9
    $region8: #{tpu_custom_call.1} parent=1 // pred_region
      %28 = vsyncadd [#allocation6], 0
      %s29 = sshll.u32 %s1, 4
      %s30 = int_to_ptr.hbm [resolvable:$true] %s29
      %s31 = sshll.u32 [#allocation5], 4
      %s32 = int_to_ptr.vmem [resolvable:$true] %s31
      %37 = dma.hbm_to_vmem [thread:$0]  %s30, 1024, %s32, [#allocation6], 256, 256, 16
    $region9: #{tpu_custom_call.1} parent=1 // pred_fallthru
      _
    // Predicated region
    $region10: #{tpu_custom_call.1} parent=1 // pred_check
      _
    $region11: #{tpu_custom_call.1} parent=1 // pred_check_branch
      %39 = sbr.rel (0) target = $region13
    $region12: #{tpu_custom_call.1} parent=1 // pred_region
      %41 = vsyncadd [#allocation6], 0
      %s43 = sshll.u32 %s2, 4
      %s44 = int_to_ptr.hbm [resolvable:$true] %s43
      %s45 = sshll.u32 [#allocation7], 4
      %s46 = int_to_ptr.vmem [resolvable:$true] %s45
      %48 = dma.hbm_to_vmem [thread:$0]  %s44, 64, %s46, [#allocation6]
    $region13: #{tpu_custom_call.1} parent=1 // pred_fallthru
      _
    // Predicated region
    $region14: #{tpu_custom_call.1} parent=1 // pred_check
      _
    $region15: #{tpu_custom_call.1} parent=1 // pred_check_branch
      %50 = sbr.rel (0) target = $region17
    $region16: #{tpu_custom_call.1} parent=1 // pred_region
      %52 = vsyncadd [#allocation9], 0
      %s54 = sshll.u32 %s3, 4
      %s55 = int_to_ptr.hbm [resolvable:$true] %s54
      %s56 = sshll.u32 [#allocation8], 4
      %s57 = int_to_ptr.vmem [resolvable:$true] %s56
      %59 = dma.hbm_to_vmem [thread:$0]  %s55, 64, %s57, [#allocation9]
    $region17: #{tpu_custom_call.1} parent=1 // pred_fallthru
      _
    // Predicated region
    $region18: #{tpu_custom_call.1} parent=1 // pred_check
      _
    $region19: #{tpu_custom_call.1} parent=1 // pred_check_branch
      %61 = sbr.rel (0) target = $region21
    $region20: #{tpu_custom_call.1} parent=1 // pred_region
      %63 = vsyncadd [#allocation9], 0
      %s65 = sshll.u32 %s4, 4
      %s66 = int_to_ptr.hbm [resolvable:$true] %s65
      %s67 = sshll.u32 [#allocation10], 4
      %s68 = int_to_ptr.vmem [resolvable:$true] %s67
      %70 = dma.hbm_to_vmem [thread:$0]  %s66, 64, %s68, [#allocation9]
    $region21: #{tpu_custom_call.1} parent=1 // pred_fallthru
      _
    // Predicated region
    $region22: #{tpu_custom_call.1} parent=1 // pred_check
      _
    $region23: #{tpu_custom_call.1} parent=1 // pred_check_branch
      %72 = sbr.rel (0) target = $region25
    $region24: #{tpu_custom_call.1} parent=1 // pred_region
      %74 = dma.done [#allocation3], 64
    $region25: #{tpu_custom_call.1} parent=1 // pred_fallthru
      _
    // Predicated region
    $region26: #{tpu_custom_call.1} parent=1 // pred_check
      _
    $region27: #{tpu_custom_call.1} parent=1 // pred_check_branch
      %76 = sbr.rel (0) target = $region29
    $region28: #{tpu_custom_call.1} parent=1 // pred_region
      %78 = dma.done [#allocation6], 1024
    $region29: #{tpu_custom_call.1} parent=1 // pred_fallthru
      _
    // Predicated region
    $region30: #{tpu_custom_call.1} parent=1 // pred_check
      _
    $region31: #{tpu_custom_call.1} parent=1 // pred_check_branch
      %80 = sbr.rel (0) target = $region33
    $region32: #{tpu_custom_call.1} parent=1 // pred_region
      %82 = dma.done [#allocation6], 64
    $region33: #{tpu_custom_call.1} parent=1 // pred_fallthru
      _
    // Predicated region
    $region34: #{tpu_custom_call.1} parent=1 // pred_check
      _
    $region35: #{tpu_custom_call.1} parent=1 // pred_check_branch
      %84 = sbr.rel (0) target = $region37
    $region36: #{tpu_custom_call.1} parent=1 // pred_region
      %86 = dma.done [#allocation9], 64
    $region37: #{tpu_custom_call.1} parent=1 // pred_fallthru
      _
    // Predicated region
    $region38: #{tpu_custom_call.1} parent=1 // pred_check
      _
    $region39: #{tpu_custom_call.1} parent=1 // pred_check_branch
      %88 = sbr.rel (0) target = $region41
    $region40: #{tpu_custom_call.1} parent=1 // pred_region
      %90 = dma.done [#allocation9], 64
    $region41: #{tpu_custom_call.1} parent=1 // pred_fallthru
      _
    %v92 = vld [vmem:[#allocation2] sm:$0xf]
    %v93 = vld [vmem:[#allocation5] sm:$0xff]
    %v94 = vld [vmem:[#allocation5 + $0x8] sm:$0xff]
    %v95 = vld [vmem:[#allocation5 + $0x10] sm:$0xff]
    %v96 = vld [vmem:[#allocation5 + $0x18] sm:$0xff]
    %v97 = vld [vmem:[#allocation5 + $0x20] sm:$0xff]
    %v98 = vld [vmem:[#allocation5 + $0x28] sm:$0xff]
    %v99 = vld [vmem:[#allocation5 + $0x30] sm:$0xff]
    %v100 = vld [vmem:[#allocation5 + $0x38] sm:$0xff]
    %v101 = vld [vmem:[#allocation7] sm:$0xf]
    %v103 = vperm.slane %v101, 0
    %v104 = vperm.slane %v101, 1
    %v105 = vperm.slane %v101, 2
    %v106 = vperm.slane %v101, 3
    %v119 = vunpack.c.l.b16 %v93
    %v120 = vunpack.c.h.b16 %v93
    %v121 = vunpack.c.l.b16 %v94
    %v122 = vunpack.c.h.b16 %v94
    %v123 = vunpack.c.l.b16 %v95
    %v124 = vunpack.c.h.b16 %v95
    %v125 = vunpack.c.l.b16 %v96
    %v126 = vunpack.c.h.b16 %v96
    %v127 = vunpack.c.l.b16 %v97
    %v128 = vunpack.c.h.b16 %v97
    %v129 = vunpack.c.l.b16 %v98
    %v130 = vunpack.c.h.b16 %v98
    %v131 = vunpack.c.l.b16 %v99
    %v132 = vunpack.c.h.b16 %v99
    %v133 = vunpack.c.l.b16 %v100
    %v134 = vunpack.c.h.b16 %v100
    %v135 = vpack.c.b16 %v123, %v119
    %v136 = vpack.c.b16 %v124, %v120
    %v137 = vpack.c.b16 %v125, %v121
    %v138 = vpack.c.b16 %v126, %v122
    %v139 = vpack.c.b16 %v131, %v127
    %v140 = vpack.c.b16 %v132, %v128
    %v141 = vpack.c.b16 %v133, %v129
    %v142 = vpack.c.b16 %v134, %v130
    %vm151 = vcmask 261120
    %v153 = vsel %vm151, %v92, 0
    %155 = vmatpush.bf16.msra.mxu0 0
    %156 = vmatpush.bf16.msra.mxu0 0
    %157 = vmatpush.bf16.msra.mxu0 0
    %158 = vmatpush.bf16.msra.mxu0 0
    %159 = vmatpush.bf16.msra.mxu0 0
    %160 = vmatpush.bf16.msra.mxu0 0
    %161 = vmatpush.bf16.msra.mxu0 %v139
    %162 = vmatpush.bf16.msra.mxu0 %v135
    %163 = vmatmul.bf16.gmra.mxu0 %v153
    %v164 = vpop.f32.mrf.mxu0
    %v165 = vadd.f32 %v103, %v164
    %v166 = vpop.f32.mrf.mxu0
    %167 = vdwg.mxu0
    %168 = vmatpush.bf16.msra.mxu0 0
    %169 = vmatpush.bf16.msra.mxu0 0
    %170 = vmatpush.bf16.msra.mxu0 0
    %171 = vmatpush.bf16.msra.mxu0 0
    %172 = vmatpush.bf16.msra.mxu0 0
    %173 = vmatpush.bf16.msra.mxu0 0
    %174 = vmatpush.bf16.msra.mxu0 %v140
    %175 = vmatpush.bf16.msra.mxu0 %v136
    %176 = vmatmul.bf16.gmra.mxu0 %v153
    %v177 = vpop.f32.mrf.mxu0
    %v178 = vadd.f32 %v104, %v177
    %v179 = vpop.f32.mrf.mxu0
    %180 = vdwg.mxu0
    %181 = vmatpush.bf16.msra.mxu0 0
    %182 = vmatpush.bf16.msra.mxu0 0
    %183 = vmatpush.bf16.msra.mxu0 0
    %184 = vmatpush.bf16.msra.mxu0 0
    %185 = vmatpush.bf16.msra.mxu0 0
    %186 = vmatpush.bf16.msra.mxu0 0
    %187 = vmatpush.bf16.msra.mxu0 %v141
    %188 = vmatpush.bf16.msra.mxu0 %v137
    %189 = vmatmul.bf16.gmra.mxu0 %v153
    %v190 = vpop.f32.mrf.mxu0
    %v191 = vadd.f32 %v105, %v190
    %v192 = vpop.f32.mrf.mxu0
    %193 = vdwg.mxu0
    %194 = vmatpush.bf16.msra.mxu0 0
    %195 = vmatpush.bf16.msra.mxu0 0
    %196 = vmatpush.bf16.msra.mxu0 0
    %197 = vmatpush.bf16.msra.mxu0 0
    %198 = vmatpush.bf16.msra.mxu0 0
    %199 = vmatpush.bf16.msra.mxu0 0
    %200 = vmatpush.bf16.msra.mxu0 %v142
    %201 = vmatpush.bf16.msra.mxu0 %v138
    %202 = vmatmul.bf16.gmra.mxu0 %v153
    %v203 = vpop.f32.mrf.mxu0
    %v204 = vadd.f32 %v106, %v203
    %v205 = vpop.f32.mrf.mxu0
    %206 = vdwg.mxu0
    %v207 = vmax.f32 %v165, 0.0
    %v208 = vmax.f32 %v178, 0.0
    %v209 = vmax.f32 %v191, 0.0
    %v210 = vmax.f32 %v204, 0.0
    %v211 = vrot.slane %v207, 4
    %v212 = vadd.f32 %v207, %v211
    %v213 = vrot.slane %v212, 2
    %v214 = vadd.f32 %v212, %v213
    %v215 = vrot.slane %v214, 1
    %v216 = vadd.f32 %v214, %v215
    %v217 = vrot.slane %v208, 4
    %v218 = vadd.f32 %v208, %v217
    %v219 = vrot.slane %v218, 2
    %v220 = vadd.f32 %v218, %v219
    %v221 = vrot.slane %v220, 1
    %v222 = vadd.f32 %v220, %v221
    %v223 = vrot.slane %v209, 4
    %v224 = vadd.f32 %v209, %v223
    %v225 = vrot.slane %v224, 2
    %v226 = vadd.f32 %v224, %v225
    %v227 = vrot.slane %v226, 1
    %v228 = vadd.f32 %v226, %v227
    %v229 = vrot.slane %v210, 4
    %v230 = vadd.f32 %v210, %v229
    %v231 = vrot.slane %v230, 2
    %v232 = vadd.f32 %v230, %v231
    %v233 = vrot.slane %v232, 1
    %v234 = vadd.f32 %v232, %v233
    %v235 = vrcp.pop 8.0
    %v236 = vmul.f32 8.0, %v235
    %v237 = vsub.f32 1.0, %v236
    %v238 = vmul.f32 %v235, %v237
    %v239 = vadd.f32 %v235, %v238
    %vm240 = vweird.f32 %v235
    %v241 = vsel %vm240, %v235, %v239
    %v242 = vmul.f32 %v216, %v241
    %v243 = vmul.f32 %v222, %v241
    %v244 = vmul.f32 %v228, %v241
    %v245 = vmul.f32 %v234, %v241
    %v246 = vsub.f32 %v207, %v242
    %v247 = vsub.f32 %v208, %v243
    %v248 = vsub.f32 %v209, %v244
    %v249 = vsub.f32 %v210, %v245
    %v250 = vmul.f32 %v246, %v246
    %v251 = vmul.f32 %v247, %v247
    %v252 = vmul.f32 %v248, %v248
    %v253 = vmul.f32 %v249, %v249
    %v254 = vrot.slane %v250, 4
    %v255 = vadd.f32 %v250, %v254
    %v256 = vrot.slane %v255, 2
    %v257 = vadd.f32 %v255, %v256
    %v258 = vrot.slane %v257, 1
    %v259 = vadd.f32 %v257, %v258
    %v260 = vrot.slane %v251, 4
    %v261 = vadd.f32 %v251, %v260
    %v262 = vrot.slane %v261, 2
    %v263 = vadd.f32 %v261, %v262
    %v264 = vrot.slane %v263, 1
    %v265 = vadd.f32 %v263, %v264
    %v266 = vrot.slane %v252, 4
    %v267 = vadd.f32 %v252, %v266
    %v268 = vrot.slane %v267, 2
    %v269 = vadd.f32 %v267, %v268
    %v270 = vrot.slane %v269, 1
    %v271 = vadd.f32 %v269, %v270
    %v272 = vrot.slane %v253, 4
    %v273 = vadd.f32 %v253, %v272
    %v274 = vrot.slane %v273, 2
    %v275 = vadd.f32 %v273, %v274
    %v276 = vrot.slane %v275, 1
    %v277 = vadd.f32 %v275, %v276
    %v278 = vmul.f32 %v259, %v241
    %v279 = vmul.f32 %v265, %v241
    %v280 = vmul.f32 %v271, %v241
    %v281 = vmul.f32 %v277, %v241
    %v282 = vadd.f32 %v278, 1e-05
    %v283 = vadd.f32 %v279, 1e-05
    %v284 = vadd.f32 %v280, 1e-05
    %v285 = vadd.f32 %v281, 1e-05
    %v286 = vrsqrt.pop %v282
    %v287 = vmul.f32 %v286, %v282
    %v288 = vmul.f32 %v287, %v286
    %v289 = vmul.f32 0.5, %v288
    %v290 = vsub.f32 1.5, %v289
    %v291 = vmul.f32 %v286, %v290
    %vm292 = vweird.f32 %v282
    %vm293 = vweird.f32 %v286
    %vm294 = vmor %vm292, %vm293
    %v295 = vsel %vm294, %v286, %v291
    %v296 = vrsqrt.pop %v283
    %v297 = vmul.f32 %v296, %v283
    %v298 = vmul.f32 %v297, %v296
    %v299 = vmul.f32 0.5, %v298
    %v300 = vsub.f32 1.5, %v299
    %v301 = vmul.f32 %v296, %v300
    %vm302 = vweird.f32 %v283
    %vm303 = vweird.f32 %v296
    %vm304 = vmor %vm302, %vm303
    %v305 = vsel %vm304, %v296, %v301
    %v306 = vrsqrt.pop %v284
    %v307 = vmul.f32 %v306, %v284
    %v308 = vmul.f32 %v307, %v306
    %v309 = vmul.f32 0.5, %v308
    %v310 = vsub.f32 1.5, %v309
    %v311 = vmul.f32 %v306, %v310
    %vm312 = vweird.f32 %v284
    %vm313 = vweird.f32 %v306
    %vm314 = vmor %vm312, %vm313
    %v315 = vsel %vm314, %v306, %v311
    %v316 = vrsqrt.pop %v285
    %v317 = vmul.f32 %v316, %v285
    %v318 = vmul.f32 %v317, %v316
    %v319 = vmul.f32 0.5, %v318
    %v320 = vsub.f32 1.5, %v319
    %v321 = vmul.f32 %v316, %v320
    %vm322 = vweird.f32 %v285
    %vm323 = vweird.f32 %v316
    %vm324 = vmor %vm322, %vm323
    %v325 = vsel %vm324, %v316, %v321
    %v326 = vld [vmem:[#allocation8] sm:$0xf]
    %v328 = vperm.slane %v326, 0
    %v329 = vperm.slane %v326, 1
    %v330 = vperm.slane %v326, 2
    %v331 = vperm.slane %v326, 3
    %v336 = vmul.f32 %v295, %v328
    %v337 = vmul.f32 %v305, %v329
    %v338 = vmul.f32 %v315, %v330
    %v339 = vmul.f32 %v325, %v331
    %v340 = vperm.slane %v336, 0
    %v341 = vperm.slane %v337, 0
    %v342 = vperm.slane %v338, 0
    %v343 = vperm.slane %v339, 0
    %v344 = vmul.f32 %v246, %v340
    %v345 = vmul.f32 %v247, %v341
    %v346 = vmul.f32 %v248, %v342
    %v347 = vmul.f32 %v249, %v343
    %v348 = vld [vmem:[#allocation10] sm:$0xf]
    %v350 = vperm.slane %v348, 0
    %v351 = vperm.slane %v348, 1
    %v352 = vperm.slane %v348, 2
    %v353 = vperm.slane %v348, 3
    %v358 = vadd.f32 %v344, %v350
    %v359 = vadd.f32 %v345, %v351
    %v360 = vadd.f32 %v346, %v352
    %v361 = vadd.f32 %v347, %v353
    %362 = vst [vmem:[#allocation11] sm:$0xff] %v358
    %363 = vst [vmem:[#allocation11 + $0x8] sm:$0xff] %v359
    %364 = vst [vmem:[#allocation11 + $0x10] sm:$0xff] %v360
    %365 = vst [vmem:[#allocation11 + $0x18] sm:$0xff] %v361
    // Predicated region
    $region42: #{tpu_custom_call.1} parent=1 // pred_check
      _
    $region43: #{tpu_custom_call.1} parent=1 // pred_check_branch
      %367 = sbr.rel (0) target = $region45
    $region44: #{tpu_custom_call.1} parent=1 // pred_region
      %369 = vsyncadd [#allocation4], 0
      %s371 = sshll.u32 [#allocation11], 4
      %s372 = int_to_ptr.vmem [resolvable:$true] %s371
      %s373 = sshll.u32 %s5, 4
      %s374 = int_to_ptr.hbm [resolvable:$true] %s373
      %376 = dma.vmem_to_hbm [thread:$0]  %s372, 512, %s374, [#allocation4]
    $region45: #{tpu_custom_call.1} parent=1 // pred_fallthru
      _
    // Predicated region
    $region46: #{tpu_custom_call.1} parent=1 // pred_check
      _
    $region47: #{tpu_custom_call.1} parent=1 // pred_check_branch
      %378 = sbr.rel (0) target = $region49
    $region48: #{tpu_custom_call.1} parent=1 // pred_region
      %380 = dma.done [#allocation4], 512
    $region49: #{tpu_custom_call.1} parent=1 // pred_fallthru
      _
    %381 = vsyncpa [#allocation3], 1
    %382 = vsyncpa [#allocation6], 1
    %383 = vsyncpa [#allocation9], 1
    %384 = vsyncpa [#allocation4], 1

</llo_original>
